<compile_context>
chip_gen: v5e
topology: v5e:2x2
jax: 0.10.0
libtpu: 0.0.40
codegen_flags: <defaults>
</compile_context>

<pallas_src>
import functools

import jax
import jax.numpy as jnp
from jax import lax
from jax.experimental import pallas as pl
from jax.experimental.pallas import tpu as pltpu


def _round_up(x, m):
    return (x + m - 1) // m * m


# ---------------------------------------------------------------------------
# Kernel: one M-tile of  (B*P, C*ps*ps) @ (C*ps*ps, D) + bias
#   xp_ref: (tm, K)  bf16   w_ref: (K, D) bf16   b_ref: (1, D) f32
#   o_ref : (tm, D)  out_dtype (bf16 by default)
# ---------------------------------------------------------------------------
def patch_embed_kernel(xp_ref, w_ref, b_ref, o_ref):
    acc = jnp.dot(xp_ref[...], w_ref[...],
                  preferred_element_type=jnp.float32)        # MXU, f32 accum
    o_ref[...] = (acc + b_ref[...]).astype(o_ref.dtype)      # fused bias add


# ---------------------------------------------------------------------------
# Tile picker: largest M-tile (multiple of 8) that
#   - is <= target_rows,
#   - fits the VMEM budget (double-buffered xp/out + single-buffered w/bias),
#   - preferably divides M exactly (no padding pass).
# ---------------------------------------------------------------------------
def _pick_tile(M, target_rows, K, D, in_itemsize, out_itemsize, budget_bytes):
    per_row = 2 * K * in_itemsize + 2 * D * out_itemsize      # double-buffered
    fixed = K * D * in_itemsize + D * 4                       # single-buffered
    cap = max(8, (budget_bytes - fixed) // max(per_row, 1))
    target = max(8, min(target_rows, cap, _round_up(M, 8)))
    target -= target % 8
    if M % 8 == 0:
        for tm in range(target, 7, -8):                       # trace-time only
            if M % tm == 0:
                return tm, M                                  # exact tiling
    tm = max(8, min(target, _round_up(M, 8)))
    return tm, _round_up(M, tm)


# ---------------------------------------------------------------------------
# Wrapper: PatchEmbedding.forward
# ---------------------------------------------------------------------------
def patch_embedding(x_nchw, w_kd, b_d, *, patch_size, block_rows=1024,
                    compute_dtype=jnp.bfloat16, out_dtype=jnp.bfloat16,
                    vmem_budget_bytes=12 * 1024 * 1024):
    """Forward pass of the PyTorch PatchEmbedding module.

    x_nchw : (B, C, H, W)   NCHW image batch (like the PyTorch module).
    w_kd   : (C*ps*ps, D)   flattened conv weight, K order = (c, ph, pw),
                            i.e. torch_conv_weight.reshape(D, -1).T
    b_d    : (D,)           conv bias.
    returns: (B, num_patches, D) == Conv2d -> Flatten(2,3) -> permute(0,2,1)
    """
    B, C, H, W = x_nchw.shape
    ps = patch_size
    Hn, Wn = H // ps, W // ps
    P = Hn * Wn
    K, D = w_kd.shape
    assert K == C * ps * ps

    # Cast to bf16 BEFORE the relayout / pallas_call: halves the bytes of both
    # the XLA relayout pass below and the kernel's input DMAs.
    x = x_nchw.astype(compute_dtype)
    w = w_kd.astype(compute_dtype)
    bias = b_d.reshape(1, D).astype(jnp.float32)   # tiny; keep f32 for accuracy

    # Glue: stride==kernel conv -> independent patch rows (B*P, C*ps*ps),
    # flattened in (c, ph, pw) order to match the conv weight reduction order.
    # The 6-D reshape is a free view; the transpose is one bf16 HBM pass.
    xp = x.reshape(B, C, Hn, ps, Wn, ps)
    xp = xp.transpose(0, 2, 4, 1, 3, 5).reshape(B * P, K)

    M = B * P
    tm, M_pad = _pick_tile(M, block_rows, K, D,
                           jnp.dtype(compute_dtype).itemsize,
                           jnp.dtype(out_dtype).itemsize,
                           vmem_budget_bytes)
    if M_pad != M:                       # only when no exact tile exists
        xp = jnp.pad(xp, ((0, M_pad - M), (0, 0)))

    out = pl.pallas_call(
        patch_embed_kernel,
        out_shape=jax.ShapeDtypeStruct((M_pad, D), out_dtype),
        grid=(M_pad // tm,),
        in_specs=[
            # patch rows: tiled over M, double-buffered behind MXU work
            pl.BlockSpec((tm, K), lambda i: (i, 0)),
            # weight / bias: grid-invariant -> single-buffered, VMEM-resident
            pl.BlockSpec((K, D), lambda i: (0, 0), pipeline_mode=pl.Buffered(1)),
            pl.BlockSpec((1, D), lambda i: (0, 0), pipeline_mode=pl.Buffered(1)),
        ],
        out_specs=pl.BlockSpec((tm, D), lambda i: (i, 0)),
        compiler_params=pltpu.CompilerParams(
            dimension_semantics=("parallel",)),   # megacore-shardable (v7x)
    )(xp, w, bias)

    if M_pad != M:
        out = out[:M]
    return out.reshape(B, P, D)


# ---------------------------------------------------------------------------
# f32 reference using the actual strided convolution (validation only)
# ---------------------------------------------------------------------------
def _reference_patch_embedding(x_nchw, w_conv_oihw, b_d, *, patch_size):
    y = lax.conv_general_dilated(
        x_nchw, w_conv_oihw,
        window_strides=(patch_size, patch_size),
        padding="VALID",
        dimension_numbers=("NCHW", "OIHW", "NCHW"))
    y = y + b_d.reshape(1, -1, 1, 1)
    B, D, Hn, Wn = y.shape
    return y.reshape(B, D, Hn * Wn).transpose(0, 2, 1)    # flatten + permute


# ---------------------------------------------------------------------------
if __name__ == "__main__":
    # Small config consistent with the module (in_channels=3, square patches).
    B, C, IMG, PS, D = 4, 3, 32, 8, 128     # num_patches = 16, M = B*P = 64

    key = jax.random.PRNGKey(0)
    kx, kw, kb = jax.random.split(key, 3)

    x = jax.random.normal(kx, (B, C, IMG, IMG), dtype=jnp.float32)       # NCHW
    # PyTorch Conv2d weight layout (D, C, ps, ps); flattened matmul form (K, D).
    w_conv = jax.random.normal(kw, (D, C, PS, PS), dtype=jnp.float32) * 0.02
    b = jax.random.normal(kb, (D,), dtype=jnp.float32) * 0.02
    w_kd = w_conv.reshape(D, C * PS * PS).T

    # Default block_rows: the tile picker takes the whole M=64 in one step here
    # (bigger tiles are strictly better on single-core v5e/v6e; real-size M
    # naturally yields >=2 steps for v7x megacore).
    fwd = jax.jit(functools.partial(patch_embedding, patch_size=PS))
    out = fwd(x, w_kd, b)
    jax.block_until_ready(out)

    P = (IMG // PS) ** 2
    assert out.shape == (B, P, D), out.shape

    ref = _reference_patch_embedding(x, w_conv, b, patch_size=PS)
    # bf16 MXU inputs + bf16 output stores vs f32 conv reference: loose tol.
    err = jnp.max(jnp.abs(out.astype(jnp.float32) - ref))
    assert jnp.allclose(out.astype(jnp.float32), ref, atol=3e-2, rtol=3e-2), \
        float(err)

    print("KERNEL_OK")
</pallas_src>

<mosaic_0001>
module attributes {stable_mosaic.version = 11 : i64} {
  func.func @patch_embed_kernel(%arg0: i32, %arg1: memref<64x192xbf16, #tpu.memory_space<vmem>>, %arg2: memref<192x128xbf16, #tpu.memory_space<vmem>>, %arg3: memref<1x128xf32, #tpu.memory_space<vmem>>, %arg4: memref<64x128xbf16, #tpu.memory_space<vmem>>) attributes {dimension_semantics = [#tpu.dimension_semantics<parallel>], iteration_bounds = array<i64: 1>, scalar_prefetch = 0 : i64, scratch_operands = 0 : i64, tpu.core_type = #tpu.core_type<tc>, window_params = [{transform_indices = @transform_0, window_bounds = array<i64: 64, 192>}, {pipeline_mode = #tpu.pipeline_mode<synchronous>, transform_indices = @transform_1, window_bounds = array<i64: 192, 128>}, {pipeline_mode = #tpu.pipeline_mode<synchronous>, transform_indices = @transform_2, window_bounds = array<i64: 1, 128>}, {transform_indices = @transform_3, window_bounds = array<i64: 64, 128>}]} {
    %c0 = arith.constant 0 : index
    %c0_0 = arith.constant 0 : index
    %0 = vector.load %arg1[%c0, %c0_0] : memref<64x192xbf16, #tpu.memory_space<vmem>>, vector<64x192xbf16>
    %c0_1 = arith.constant 0 : index
    %c0_2 = arith.constant 0 : index
    %1 = vector.load %arg2[%c0_1, %c0_2] : memref<192x128xbf16, #tpu.memory_space<vmem>>, vector<192x128xbf16>
    %cst = arith.constant dense<0.000000e+00> : vector<64x128xf32>
    %2 = tpu.matmul %0, %1, %cst {dimension_numbers = #tpu.dot_dimension_numbers<[1], [0], [0], [1], [0, 0, 1, 1], [], []>} : vector<64x192xbf16>, vector<192x128xbf16>, vector<64x128xf32> -> vector<64x128xf32>
    %c0_3 = arith.constant 0 : index
    %c0_4 = arith.constant 0 : index
    %3 = vector.load %arg3[%c0_3, %c0_4] : memref<1x128xf32, #tpu.memory_space<vmem>>, vector<1x128xf32>
    %4 = vector.broadcast %3 : vector<1x128xf32> to vector<64x128xf32>
    %5 = arith.addf %2, %4 : vector<64x128xf32>
    %6 = arith.truncf %5 : vector<64x128xf32> to vector<64x128xbf16>
    %c0_5 = arith.constant 0 : index
    %c0_6 = arith.constant 0 : index
    %7 = vector.load %arg4[%c0_5, %c0_6] : memref<64x128xbf16, #tpu.memory_space<vmem>>, vector<64x128xbf16>
    tpu.vector_store %arg4[%c0_5, %c0_6], %6 {strides = array<i32>} : memref<64x128xbf16, #tpu.memory_space<vmem>>, vector<64x128xbf16>,
    return
  }
  func.func @transform_0(%arg0: i32) -> (i32, i32) {
    %c0_i32 = arith.constant 0 : i32
    %c0_i32_0 = arith.constant 0 : i32
    return %arg0, %c0_i32 : i32, i32
  }
  func.func @transform_1(%arg0: i32) -> (i32, i32) {
    %c0_i32 = arith.constant 0 : i32
    %c0_i32_0 = arith.constant 0 : i32
    %c0_i32_1 = arith.constant 0 : i32
    return %c0_i32, %c0_i32_0 : i32, i32
  }
  func.func @transform_2(%arg0: i32) -> (i32, i32) {
    %c0_i32 = arith.constant 0 : i32
    %c0_i32_0 = arith.constant 0 : i32
    %c0_i32_1 = arith.constant 0 : i32
    return %c0_i32, %c0_i32_0 : i32, i32
  }
  func.func @transform_3(%arg0: i32) -> (i32, i32) {
    %c0_i32 = arith.constant 0 : i32
    %c0_i32_0 = arith.constant 0 : i32
    return %arg0, %c0_i32 : i32, i32
  }
}

</mosaic_0001>

<llo_original>
// kernel: patch_embedding.1
$region0: #{patch_embedding.1}
  #allocation0 [shape = 'u32[]', space=smem, size = 0x4, offset = 0x4, fixed_abs, tag = 'smem constant byte address 0x4 - core index']
  #allocation1 [shape = 'u32[72,128]{1,0:T(1,128)}', space=vmem, size = 0x9000, scoped, tag = 'internal scratch']
  %s0 = inlined_call_operand.vmem [shape: bf16[64,192], index: 0, kind: input, shape index: {}]
  %s1 = inlined_call_operand.vmem [shape: bf16[192,128], index: 1, kind: input, shape index: {}]
  %s2 = inlined_call_operand.vmem [shape: f32[1,128], index: 2, kind: input, shape index: {}]
  %s3 = inlined_call_operand.hbm [shape: bf16[64,128], index: 3, kind: output, shape index: {}]
  %s4 = sld [smem:[#allocation0]]
  $region22: #{patch_embedding.1} parent=0
    _
  %s6 = ssub.s32 1, %s4
  %s7 = scalar_select 0, %s6, %s4
  $region1: #{patch_embedding.1} parent=0
    #allocation2 [shape = 'u8[16384]{0}', space=vmem, size = 0x4000, scoped, tag = 'output window, operand 0, single buffered']
    #allocation3 [shape = 's32[1]{0}', space=sflag, size = 0x4, scoped, tag = 'scoped memory for patch_embedding.1']
    %8 = vsyncpa [#allocation3], 0
    // Predicated region
    $region2: #{patch_embedding.1} parent=1 // pred_check
      _
    $region3: #{patch_embedding.1} parent=1 // pred_check_branch
      %10 = sbr.rel (0) target = $region5
    $region4: #{patch_embedding.1} parent=1 // pred_region
      _
    $region5: #{patch_embedding.1} parent=1 // pred_fallthru
      _
    // Predicated region
    $region6: #{patch_embedding.1} parent=1 // pred_check
      _
    $region7: #{patch_embedding.1} parent=1 // pred_check_branch
      %12 = sbr.rel (0) target = $region9
    $region8: #{patch_embedding.1} parent=1 // pred_region
      _
    $region9: #{patch_embedding.1} parent=1 // pred_fallthru
      _
    // Predicated region
    $region10: #{patch_embedding.1} parent=1 // pred_check
      _
    $region11: #{patch_embedding.1} parent=1 // pred_check_branch
      %14 = sbr.rel (0) target = $region13
    $region12: #{patch_embedding.1} parent=1 // pred_region
      _
    $region13: #{patch_embedding.1} parent=1 // pred_fallthru
      _
    %v16 = vld [vmem:[%s0] sm:$0xff]
    %v17 = vld [vmem:[%s0 + $0x8] sm:$0xff]
    %v18 = vld [vmem:[%s0 + $0x10] sm:$0xff]
    %v19 = vld [vmem:[%s0 + $0x18] sm:$0xff]
    %v20 = vld [vmem:[%s0 + $0x20] sm:$0xff]
    %v21 = vld [vmem:[%s0 + $0x28] sm:$0xff]
    %v22 = vld [vmem:[%s0 + $0x30] sm:$0xff]
    %v23 = vld [vmem:[%s0 + $0x38] sm:$0xff]
    %v24 = vld [vmem:[%s1] sm:$0xf]
    %v25 = vld [vmem:[%s1 + $0x4] sm:$0xf]
    %v26 = vld [vmem:[%s1 + $0x8] sm:$0xf]
    %v27 = vld [vmem:[%s1 + $0xc] sm:$0xf]
    %v28 = vld [vmem:[%s1 + $0x10] sm:$0xf]
    %v29 = vld [vmem:[%s1 + $0x14] sm:$0xf]
    %v30 = vld [vmem:[%s1 + $0x18] sm:$0xf]
    %v31 = vld [vmem:[%s1 + $0x1c] sm:$0xf]
    %v32 = vld [vmem:[%s1 + $0x20] sm:$0xf]
    %v33 = vld [vmem:[%s1 + $0x24] sm:$0xf]
    %v34 = vld [vmem:[%s1 + $0x28] sm:$0xf]
    %v35 = vld [vmem:[%s1 + $0x2c] sm:$0xf]
    %v36 = vld [vmem:[%s1 + $0x30] sm:$0xf]
    %v37 = vld [vmem:[%s1 + $0x34] sm:$0xf]
    %v38 = vld [vmem:[%s1 + $0x38] sm:$0xf]
    %v39 = vld [vmem:[%s1 + $0x3c] sm:$0xf]
    %v40 = vld [vmem:[%s1 + $0x40] sm:$0xf]
    %v41 = vld [vmem:[%s1 + $0x44] sm:$0xf]
    %v42 = vld [vmem:[%s1 + $0x48] sm:$0xf]
    %v43 = vld [vmem:[%s1 + $0x4c] sm:$0xf]
    %v44 = vld [vmem:[%s1 + $0x50] sm:$0xf]
    %v45 = vld [vmem:[%s1 + $0x54] sm:$0xf]
    %v46 = vld [vmem:[%s1 + $0x58] sm:$0xf]
    %v47 = vld [vmem:[%s1 + $0x5c] sm:$0xf]
    %v48 = vld [vmem:[%s2] sm:$0x1]
    %v50 = vperm.slane %v48, 0
    %v60 = vunpack.c.l.b16 %v16
    %v61 = vunpack.c.h.b16 %v16
    %v62 = vunpack.c.l.b16 %v17
    %v63 = vunpack.c.h.b16 %v17
    %v64 = vunpack.c.l.b16 %v18
    %v65 = vunpack.c.h.b16 %v18
    %v66 = vunpack.c.l.b16 %v19
    %v67 = vunpack.c.h.b16 %v19
    %v68 = vunpack.c.l.b16 %v20
    %v69 = vunpack.c.h.b16 %v20
    %v70 = vunpack.c.l.b16 %v21
    %v71 = vunpack.c.h.b16 %v21
    %v72 = vunpack.c.l.b16 %v22
    %v73 = vunpack.c.h.b16 %v22
    %v74 = vunpack.c.l.b16 %v23
    %v75 = vunpack.c.h.b16 %v23
    %v76 = vpack.c.b16 %v62, %v60
    %v77 = vpack.c.b16 %v63, %v61
    %v78 = vpack.c.b16 %v66, %v64
    %v79 = vpack.c.b16 %v67, %v65
    %v80 = vpack.c.b16 %v70, %v68
    %v81 = vpack.c.b16 %v71, %v69
    %v82 = vpack.c.b16 %v74, %v72
    %v83 = vpack.c.b16 %v75, %v73
    %v112 = vunpack.c.l.b16 %v24
    %v113 = vunpack.c.l.b16 %v25
    %v114 = vunpack.c.l.b16 %v26
    %v115 = vunpack.c.l.b16 %v27
    %v116 = vunpack.c.l.b16 %v28
    %v117 = vunpack.c.l.b16 %v29
    %v118 = vunpack.c.l.b16 %v30
    %v119 = vunpack.c.l.b16 %v31
    %v120 = vunpack.c.l.b16 %v32
    %v121 = vunpack.c.l.b16 %v33
    %v122 = vunpack.c.l.b16 %v34
    %v123 = vunpack.c.l.b16 %v35
    %v124 = vunpack.c.l.b16 %v36
    %v125 = vunpack.c.l.b16 %v37
    %v126 = vunpack.c.l.b16 %v38
    %v127 = vunpack.c.l.b16 %v39
    %v128 = vunpack.c.l.b16 %v40
    %v129 = vunpack.c.l.b16 %v41
    %v130 = vunpack.c.l.b16 %v42
    %v131 = vunpack.c.l.b16 %v43
    %v132 = vunpack.c.l.b16 %v44
    %v133 = vunpack.c.l.b16 %v45
    %v134 = vunpack.c.l.b16 %v46
    %v135 = vunpack.c.l.b16 %v47
    %v136 = vpack.c.b16 %v113, %v112
    %v137 = vpack.c.b16 %v115, %v114
    %v138 = vpack.c.b16 %v117, %v116
    %v139 = vpack.c.b16 %v119, %v118
    %v140 = vpack.c.b16 %v121, %v120
    %v141 = vpack.c.b16 %v123, %v122
    %v142 = vpack.c.b16 %v125, %v124
    %v143 = vpack.c.b16 %v127, %v126
    %v144 = vpack.c.b16 %v129, %v128
    %v145 = vpack.c.b16 %v131, %v130
    %v146 = vpack.c.b16 %v133, %v132
    %v147 = vpack.c.b16 %v135, %v134
    %vm160 = vcmask 523264
    %v162 = vsel %vm160, %v77, 0
    %v165 = vsel %vm160, %v79, 0
    %v168 = vsel %vm160, %v81, 0
    %v171 = vsel %vm160, %v83, 0
    %173 = vmatpush.bf16.msra.mxu0 %v143
    %174 = vmatpush.bf16.msra.mxu0 %v142
    %175 = vmatpush.bf16.msra.mxu0 %v141
    %176 = vmatpush.bf16.msra.mxu0 %v140
    %177 = vmatpush.bf16.msra.mxu0 %v139
    %178 = vmatpush.bf16.msra.mxu0 %v138
    %179 = vmatpush.bf16.msra.mxu0 %v137
    %180 = vmatpush.bf16.msra.mxu0 %v136
    %181 = vmatmul.bf16.gmra.mxu0 %v76
    %v182 = vpop.f32.mrf.mxu0
    %v183 = vadd.f32 %v50, %v182
    %v184 = vpop.f32.mrf.mxu0
    %v185 = vadd.f32 %v50, %v184
    %186 = vmatmul.bf16.gmra.mxu0 %v78
    %v187 = vpop.f32.mrf.mxu0
    %v188 = vadd.f32 %v50, %v187
    %v189 = vpop.f32.mrf.mxu0
    %v190 = vadd.f32 %v50, %v189
    %191 = vmatmul.bf16.gmra.mxu0 %v80
    %v192 = vpop.f32.mrf.mxu0
    %v193 = vadd.f32 %v50, %v192
    %v194 = vpop.f32.mrf.mxu0
    %v195 = vadd.f32 %v50, %v194
    %196 = vmatmul.bf16.gmra.mxu0 %v82
    %v197 = vpop.f32.mrf.mxu0
    %v198 = vadd.f32 %v50, %v197
    %v199 = vpop.f32.mrf.mxu0
    %v200 = vadd.f32 %v50, %v199
    %201 = vdwg.mxu0
    %202 = vmatpush.bf16.msra.mxu0 0
    %203 = vmatpush.bf16.msra.mxu0 0
    %204 = vmatpush.bf16.msra.mxu0 0
    %205 = vmatpush.bf16.msra.mxu0 0
    %206 = vmatpush.bf16.msra.mxu0 %v147
    %207 = vmatpush.bf16.msra.mxu0 %v146
    %208 = vmatpush.bf16.msra.mxu0 %v145
    %209 = vmatpush.bf16.msra.mxu0 %v144
    %210 = vmatmul.bf16.gmra.mxu0 %v162
    %v211 = vpop.f32.mrf.mxu0
    %v212 = vadd.f32 %v183, %v211
    %v213 = vpop.f32.mrf.mxu0
    %v214 = vadd.f32 %v185, %v213
    %215 = vmatmul.bf16.gmra.mxu0 %v165
    %v216 = vpop.f32.mrf.mxu0
    %v217 = vadd.f32 %v188, %v216
    %v218 = vpop.f32.mrf.mxu0
    %v219 = vadd.f32 %v190, %v218
    %220 = vmatmul.bf16.gmra.mxu0 %v168
    %v221 = vpop.f32.mrf.mxu0
    %v222 = vadd.f32 %v193, %v221
    %v223 = vpop.f32.mrf.mxu0
    %v224 = vadd.f32 %v195, %v223
    %225 = vmatmul.bf16.gmra.mxu0 %v171
    %v226 = vpop.f32.mrf.mxu0
    %v227 = vadd.f32 %v198, %v226
    %v228 = vpop.f32.mrf.mxu0
    %v229 = vadd.f32 %v200, %v228
    %230 = vdwg.mxu0
    %v231 = vpack.c.bf16 %v212, %v212
    %v232 = vpack.c.bf16 %v214, %v214
    %v233 = vpack.c.bf16 %v217, %v217
    %v234 = vpack.c.bf16 %v219, %v219
    %v235 = vpack.c.bf16 %v222, %v222
    %v236 = vpack.c.bf16 %v224, %v224
    %v237 = vpack.c.bf16 %v227, %v227
    %v238 = vpack.c.bf16 %v229, %v229
    %239 = vst [vmem:[#allocation2] sm:$0xf] %v231
    %240 = vst [vmem:[#allocation2 + $0x4] sm:$0xf] %v232
    %241 = vst [vmem:[#allocation2 + $0x8] sm:$0xf] %v233
    %242 = vst [vmem:[#allocation2 + $0xc] sm:$0xf] %v234
    %243 = vst [vmem:[#allocation2 + $0x10] sm:$0xf] %v235
    %244 = vst [vmem:[#allocation2 + $0x14] sm:$0xf] %v236
    %245 = vst [vmem:[#allocation2 + $0x18] sm:$0xf] %v237
    %246 = vst [vmem:[#allocation2 + $0x1c] sm:$0xf] %v238
    // Predicated region
    $region14: #{patch_embedding.1} parent=1 // pred_check
      _
    $region15: #{patch_embedding.1} parent=1 // pred_check_branch
      %248 = sbr.rel (0) target = $region17
    $region16: #{patch_embedding.1} parent=1 // pred_region
      %250 = vsyncadd [#allocation3], 0
      %s251 = sshll.u32 [#allocation2], 4
      %s252 = int_to_ptr.vmem [resolvable:$true] %s251
      %s253 = sshll.u32 %s3, 4
      %s254 = int_to_ptr.hbm [resolvable:$true] %s253
      %259 = dma.vmem_to_hbm [thread:$0]  %s252, 512, %s254, [#allocation3], 64, 64, 4
    $region17: #{patch_embedding.1} parent=1 // pred_fallthru
      _
    // Predicated region
    $region18: #{patch_embedding.1} parent=1 // pred_check
      _
    $region19: #{patch_embedding.1} parent=1 // pred_check_branch
      %261 = sbr.rel (0) target = $region21
    $region20: #{patch_embedding.1} parent=1 // pred_region
      %263 = dma.done [#allocation3], 512
    $region21: #{patch_embedding.1} parent=1 // pred_fallthru
      _
    %264 = vsyncpa [#allocation3], 1

</llo_original>
